<compile_context>
chip_gen: v7x
topology: tpu7x:2x2x1
jax: 0.10.0
libtpu: 0.0.40
codegen_flags: <defaults>
</compile_context>

<pallas_src>
import jax
import jax.numpy as jnp
from jax.experimental import pallas as pl
from jax.experimental.pallas import tpu as pltpu


def tied_ae_kernel(x_ref, wt_ref, w_ref, rec_ref, enc_ref):
    # Cast the x tile to the MXU compute dtype in VMEM (no extra HBM traffic).
    x = x_ref[...].astype(wt_ref.dtype)                    # (TM, D_in)

    # encoded = relu(x @ W.T), computed as x @ W_T (standard contraction,
    # no transposed operand), f32 accumulation on the MXU.
    enc = jnp.dot(x, wt_ref[...], preferred_element_type=jnp.float32)
    enc = jnp.maximum(enc, 0.0)
    enc_ref[...] = enc.astype(enc_ref.dtype)

    # reconstructed = encoded @ W (tied weights). Reuse the hot f32 `enc`
    # accumulator (cast to the MXU dtype), no VMEM round trip through enc_ref.
    rec = jnp.dot(enc.astype(w_ref.dtype), w_ref[...],
                  preferred_element_type=jnp.float32)
    rec_ref[...] = rec.astype(rec_ref.dtype)


def _round_up(a, b):
    return -(-a // b) * b


def _cdiv(a, b):
    return -(-a // b)


def _vmem_capacity_bytes():
    """Physical VMEM per TensorCore; conservative 64 MiB (v7x) fallback."""
    try:
        cap = getattr(pltpu.get_tpu_info(), "vmem_capacity_bytes", None)
        if cap:
            return int(cap)
    except Exception:
        pass
    return 64 * 2**20


def _footprint_bytes(tm, d_in, d_enc, x_bytes, out_bytes, w_bytes, w_bufs):
    # Double-buffered pipelined tiles: x in, reconstructed + encoded out.
    tiles = 2 * tm * (d_in * x_bytes + d_in * out_bytes + d_enc * out_bytes)
    # Resident W and W^T.
    weights = 2 * w_bufs * d_enc * d_in * w_bytes
    # In-kernel temporaries: f32 accumulator + casted operands (approx).
    scratch = tm * d_enc * 4 + tm * (d_in + d_enc) * w_bytes
    return tiles + weights + scratch


def tied_autoencoder(x, w, *, block_m=512, compute_dtype=jnp.bfloat16):
    """Forward pass of TiedAutoencoder.

    x: (batch, input_dim)
    w: (encoding_dim, input_dim)  (== nn.Linear(input_dim, encoding_dim).weight)
    returns (reconstructed (batch, input_dim), encoded (batch, encoding_dim))
    """
    batch, input_dim = x.shape
    encoding_dim, w_in = w.shape
    assert w_in == input_dim, "weight must be (encoding_dim, input_dim)"
    # NOTE: keep input_dim / encoding_dim multiples of 128 for lane-dense
    # stores (matters most on v5e's single vector-store slot).

    w_c = w.astype(compute_dtype)        # (D_enc, D_in), resident
    wt_c = w_c.T                         # (D_in, D_enc), one-time XLA transpose

    x_bytes = jnp.dtype(x.dtype).itemsize
    out_bytes = x_bytes
    w_bytes = jnp.dtype(compute_dtype).itemsize

    # Sublane packing multiple for the batch (second-to-last) dim of the tile.
    sub = 8 * max(1, 4 // x_bytes)

    vmem_cap = _vmem_capacity_bytes()
    budget = int(0.7 * vmem_cap)

    # Largest batch tile that fits the VMEM budget (biggest tile wins for a
    # bandwidth-bound kernel; per-grid-step overhead ~0.35us).
    tm = _round_up(min(block_m, _round_up(batch, sub)), sub)
    while tm > sub and _footprint_bytes(tm, input_dim, encoding_dim,
                                        x_bytes, out_bytes, w_bytes, 1) > budget:
        tm = _round_up(tm // 2, sub)

    # Give v7x's second TensorCore work when a large batch would otherwise
    # collapse to a single grid step.
    if _cdiv(batch, tm) < 2 and batch >= 256:
        tm = max(128, _round_up(_cdiv(batch, 2), sub))

    grid = (_cdiv(batch, tm),)

    footprint = _footprint_bytes(tm, input_dim, encoding_dim,
                                 x_bytes, out_bytes, w_bytes, 2)
    vmem_limit = int(min(max(int(footprint * 1.3), 32 * 2**20),
                         int(0.9 * vmem_cap)))

    out_shape = (
        jax.ShapeDtypeStruct((batch, input_dim), x.dtype),      # reconstructed
        jax.ShapeDtypeStruct((batch, encoding_dim), x.dtype),   # encoded
    )

    cost = pl.CostEstimate(
        flops=4 * batch * input_dim * encoding_dim,             # two matmuls
        transcendentals=0,
        bytes_accessed=(batch * input_dim * x_bytes
                        + 2 * encoding_dim * input_dim * w_bytes    # W and W^T
                        + batch * input_dim * out_bytes
                        + batch * encoding_dim * out_bytes),
    )

    def build(w_pipeline_mode):
        def w_spec(shape):
            if w_pipeline_mode is None:
                return pl.BlockSpec(shape, lambda i: (0, 0))
            return pl.BlockSpec(shape, lambda i: (0, 0),
                                pipeline_mode=w_pipeline_mode)

        return pl.pallas_call(
            tied_ae_kernel,
            out_shape=out_shape,
            grid=grid,
            in_specs=[
                pl.BlockSpec((tm, input_dim), lambda i: (i, 0)),     # x tile
                w_spec((input_dim, encoding_dim)),                   # W^T resident
                w_spec((encoding_dim, input_dim)),                   # W  resident
            ],
            out_specs=(
                pl.BlockSpec((tm, input_dim), lambda i: (i, 0)),     # rec tile
                pl.BlockSpec((tm, encoding_dim), lambda i: (i, 0)),  # enc tile
            ),
            compiler_params=pltpu.CompilerParams(
                dimension_semantics=("parallel",),
                vmem_limit_bytes=vmem_limit,
            ),
            cost_estimate=cost,
        )

    try:
        # W / W^T block indices never change -> single-buffer them.
        rec, enc = build(pl.Buffered(1))(x, wt_c, w_c)
    except Exception:
        # Fallback if this Pallas version rejects pipeline_mode / Buffered(1).
        rec, enc = build(None)(x, wt_c, w_c)
    return rec, enc


if __name__ == "__main__":
    input_dim, encoding_dim = 256, 128

    key = jax.random.PRNGKey(0)
    kx, kw, kx2 = jax.random.split(key, 3)
    # Deterministic "init" of the tied Linear weight
    # (shape == nn.Linear(input_dim, encoding_dim).weight).
    w = jax.random.normal(kw, (encoding_dim, input_dim), dtype=jnp.float32) * 0.05

    def reference(xv, wv):
        enc = jnp.maximum(xv @ wv.T, 0.0)
        return enc @ wv, enc

    # 1) f32 compute path: structural correctness check.
    x = jax.random.normal(kx, (8, input_dim), dtype=jnp.float32)
    rec, enc = jax.block_until_ready(
        tied_autoencoder(x, w, compute_dtype=jnp.float32))
    rec_r, enc_r = reference(x, w)
    assert rec.shape == (8, input_dim) and enc.shape == (8, encoding_dim)
    assert jnp.allclose(enc, enc_r, atol=1e-2, rtol=1e-2)
    assert jnp.allclose(rec, rec_r, atol=1e-2, rtol=1e-2)

    # 2) Default bf16 MXU path (f32 accumulation) on a non-divisible batch:
    #    exercises the no-pad / no-slice edge-block handling.
    x2 = jax.random.normal(kx2, (13, input_dim), dtype=jnp.float32)
    rec2, enc2 = jax.block_until_ready(tied_autoencoder(x2, w))
    rec2_r, enc2_r = reference(x2, w)
    assert rec2.shape == (13, input_dim) and enc2.shape == (13, encoding_dim)
    assert jnp.allclose(enc2, enc2_r, atol=5e-2, rtol=5e-2)
    assert jnp.allclose(rec2, rec2_r, atol=5e-2, rtol=5e-2)

    print("KERNEL_OK")
</pallas_src>

<mosaic_0001>
module attributes {stable_mosaic.version = 11 : i64} {
  func.func @tied_ae_kernel(%arg0: i32, %arg1: memref<8x256xf32, #tpu.memory_space<vmem>>, %arg2: memref<256x128xf32, #tpu.memory_space<vmem>>, %arg3: memref<128x256xf32, #tpu.memory_space<vmem>>, %arg4: memref<8x256xf32, #tpu.memory_space<vmem>>, %arg5: memref<8x128xf32, #tpu.memory_space<vmem>>) attributes {dimension_semantics = [#tpu.dimension_semantics<parallel>], iteration_bounds = array<i64: 1>, scalar_prefetch = 0 : i64, scratch_operands = 0 : i64, tpu.core_type = #tpu.core_type<tc>, window_params = [{transform_indices = @transform_0, window_bounds = array<i64: 8, 256>}, {pipeline_mode = #tpu.pipeline_mode<synchronous>, transform_indices = @transform_1, window_bounds = array<i64: 256, 128>}, {pipeline_mode = #tpu.pipeline_mode<synchronous>, transform_indices = @transform_2, window_bounds = array<i64: 128, 256>}, {transform_indices = @transform_3, window_bounds = array<i64: 8, 256>}, {transform_indices = @transform_4, window_bounds = array<i64: 8, 128>}]} {
    %c0 = arith.constant 0 : index
    %c0_0 = arith.constant 0 : index
    %0 = vector.load %arg1[%c0, %c0_0] : memref<8x256xf32, #tpu.memory_space<vmem>>, vector<8x256xf32>
    %c0_1 = arith.constant 0 : index
    %c0_2 = arith.constant 0 : index
    %1 = vector.load %arg2[%c0_1, %c0_2] : memref<256x128xf32, #tpu.memory_space<vmem>>, vector<256x128xf32>
    %cst = arith.constant dense<0.000000e+00> : vector<8x128xf32>
    %2 = tpu.matmul %0, %1, %cst {dimension_numbers = #tpu.dot_dimension_numbers<[1], [0], [0], [1], [0, 0, 1, 1], [], []>} : vector<8x256xf32>, vector<256x128xf32>, vector<8x128xf32> -> vector<8x128xf32>
    %cst_3 = arith.constant 0.000000e+00 : f32
    %3 = vector.broadcast %cst_3 : f32 to vector<8x128xf32>
    %4 = arith.maximumf %2, %3 : vector<8x128xf32>
    %c0_4 = arith.constant 0 : index
    %c0_5 = arith.constant 0 : index
    %5 = vector.load %arg5[%c0_4, %c0_5] : memref<8x128xf32, #tpu.memory_space<vmem>>, vector<8x128xf32>
    tpu.vector_store %arg5[%c0_4, %c0_5], %4 {strides = array<i32>} : memref<8x128xf32, #tpu.memory_space<vmem>>, vector<8x128xf32>,
    %c0_6 = arith.constant 0 : index
    %c0_7 = arith.constant 0 : index
    %6 = vector.load %arg3[%c0_6, %c0_7] : memref<128x256xf32, #tpu.memory_space<vmem>>, vector<128x256xf32>
    %cst_8 = arith.constant dense<0.000000e+00> : vector<8x256xf32>
    %7 = tpu.matmul %4, %6, %cst_8 {dimension_numbers = #tpu.dot_dimension_numbers<[1], [0], [0], [1], [0, 0, 1, 1], [], []>} : vector<8x128xf32>, vector<128x256xf32>, vector<8x256xf32> -> vector<8x256xf32>
    %c0_9 = arith.constant 0 : index
    %c0_10 = arith.constant 0 : index
    %8 = vector.load %arg4[%c0_9, %c0_10] : memref<8x256xf32, #tpu.memory_space<vmem>>, vector<8x256xf32>
    tpu.vector_store %arg4[%c0_9, %c0_10], %7 {strides = array<i32>} : memref<8x256xf32, #tpu.memory_space<vmem>>, vector<8x256xf32>,
    return
  }
  func.func @transform_0(%arg0: i32) -> (i32, i32) {
    %c0_i32 = arith.constant 0 : i32
    %c0_i32_0 = arith.constant 0 : i32
    return %arg0, %c0_i32 : i32, i32
  }
  func.func @transform_1(%arg0: i32) -> (i32, i32) {
    %c0_i32 = arith.constant 0 : i32
    %c0_i32_0 = arith.constant 0 : i32
    %c0_i32_1 = arith.constant 0 : i32
    return %c0_i32, %c0_i32_0 : i32, i32
  }
  func.func @transform_2(%arg0: i32) -> (i32, i32) {
    %c0_i32 = arith.constant 0 : i32
    %c0_i32_0 = arith.constant 0 : i32
    %c0_i32_1 = arith.constant 0 : i32
    return %c0_i32, %c0_i32_0 : i32, i32
  }
  func.func @transform_3(%arg0: i32) -> (i32, i32) {
    %c0_i32 = arith.constant 0 : i32
    %c0_i32_0 = arith.constant 0 : i32
    return %arg0, %c0_i32 : i32, i32
  }
  func.func @transform_4(%arg0: i32) -> (i32, i32) {
    %c0_i32 = arith.constant 0 : i32
    %c0_i32_0 = arith.constant 0 : i32
    return %arg0, %c0_i32 : i32, i32
  }
}

module attributes {stable_mosaic.version = 11 : i64} {
  func.func @tied_ae_kernel(%arg0: i32, %arg1: memref<8x256xf32, #tpu.memory_space<vmem>>, %arg2: memref<256x128xf32, #tpu.memory_space<vmem>>, %arg3: memref<128x256xf32, #tpu.memory_space<vmem>>, %arg4: memref<8x256xf32, #tpu.memory_space<vmem>>, %arg5: memref<8x128xf32, #tpu.memory_space<vmem>>) attributes {dimension_semantics = [#tpu.dimension_semantics<parallel>], iteration_bounds = array<i64: 1>, scalar_prefetch = 0 : i64, scratch_operands = 0 : i64, tpu.core_type = #tpu.core_type<tc>, window_params = [{transform_indices = @transform_0, window_bounds = array<i64: 8, 256>}, {pipeline_mode = #tpu.pipeline_mode<synchronous>, transform_indices = @transform_1, window_bounds = array<i64: 256, 128>}, {pipeline_mode = #tpu.pipeline_mode<synchronous>, transform_indices = @transform_2, window_bounds = array<i64: 128, 256>}, {transform_indices = @transform_3, window_bounds = array<i64: 8, 256>}, {transform_indices = @transform_4, window_bounds = array<i64: 8, 128>}]} {
    %c0 = arith.constant 0 : index
    %c0_0 = arith.constant 0 : index
    %0 = vector.load %arg1[%c0, %c0_0] : memref<8x256xf32, #tpu.memory_space<vmem>>, vector<8x256xf32>
    %c0_1 = arith.constant 0 : index
    %c0_2 = arith.constant 0 : index
    %1 = vector.load %arg2[%c0_1, %c0_2] : memref<256x128xf32, #tpu.memory_space<vmem>>, vector<256x128xf32>
    %cst = arith.constant dense<0.000000e+00> : vector<8x128xf32>
    %2 = tpu.matmul %0, %1, %cst {dimension_numbers = #tpu.dot_dimension_numbers<[1], [0], [0], [1], [0, 0, 1, 1], [], []>} : vector<8x256xf32>, vector<256x128xf32>, vector<8x128xf32> -> vector<8x128xf32>
    %cst_3 = arith.constant 0.000000e+00 : f32
    %3 = vector.broadcast %cst_3 : f32 to vector<8x128xf32>
    %4 = arith.maximumf %2, %3 : vector<8x128xf32>
    %c0_4 = arith.constant 0 : index
    %c0_5 = arith.constant 0 : index
    %5 = vector.load %arg5[%c0_4, %c0_5] : memref<8x128xf32, #tpu.memory_space<vmem>>, vector<8x128xf32>
    tpu.vector_store %arg5[%c0_4, %c0_5], %4 {strides = array<i32>} : memref<8x128xf32, #tpu.memory_space<vmem>>, vector<8x128xf32>,
    %c0_6 = arith.constant 0 : index
    %c0_7 = arith.constant 0 : index
    %6 = vector.load %arg3[%c0_6, %c0_7] : memref<128x256xf32, #tpu.memory_space<vmem>>, vector<128x256xf32>
    %cst_8 = arith.constant dense<0.000000e+00> : vector<8x256xf32>
    %7 = tpu.matmul %4, %6, %cst_8 {dimension_numbers = #tpu.dot_dimension_numbers<[1], [0], [0], [1], [0, 0, 1, 1], [], []>} : vector<8x128xf32>, vector<128x256xf32>, vector<8x256xf32> -> vector<8x256xf32>
    %c0_9 = arith.constant 0 : index
    %c0_10 = arith.constant 0 : index
    %8 = vector.load %arg4[%c0_9, %c0_10] : memref<8x256xf32, #tpu.memory_space<vmem>>, vector<8x256xf32>
    tpu.vector_store %arg4[%c0_9, %c0_10], %7 {strides = array<i32>} : memref<8x256xf32, #tpu.memory_space<vmem>>, vector<8x256xf32>,
    return
  }
  func.func @transform_0(%arg0: i32) -> (i32, i32) {
    %c0_i32 = arith.constant 0 : i32
    %c0_i32_0 = arith.constant 0 : i32
    return %arg0, %c0_i32 : i32, i32
  }
  func.func @transform_1(%arg0: i32) -> (i32, i32) {
    %c0_i32 = arith.constant 0 : i32
    %c0_i32_0 = arith.constant 0 : i32
    %c0_i32_1 = arith.constant 0 : i32
    return %c0_i32, %c0_i32_0 : i32, i32
  }
  func.func @transform_2(%arg0: i32) -> (i32, i32) {
    %c0_i32 = arith.constant 0 : i32
    %c0_i32_0 = arith.constant 0 : i32
    %c0_i32_1 = arith.constant 0 : i32
    return %c0_i32, %c0_i32_0 : i32, i32
  }
  func.func @transform_3(%arg0: i32) -> (i32, i32) {
    %c0_i32 = arith.constant 0 : i32
    %c0_i32_0 = arith.constant 0 : i32
    return %arg0, %c0_i32 : i32, i32
  }
  func.func @transform_4(%arg0: i32) -> (i32, i32) {
    %c0_i32 = arith.constant 0 : i32
    %c0_i32_0 = arith.constant 0 : i32
    return %arg0, %c0_i32 : i32, i32
  }
}

</mosaic_0001>

<llo_original>
// kernel: tpu_custom_call.1
$region0: #{tpu_custom_call.1}
  #allocation0 [shape = 'u32[]', space=smem, size = 0x4, offset = 0x4, fixed_abs, tag = 'smem constant byte address 0x4 - core index']
  #allocation1 [shape = 'u32[144,128]{1,0:T(1,128)}', space=vmem, size = 0x12000, scoped, tag = 'internal scratch']
  %s0 = inlined_call_operand.hbm [shape: f32[8,256], index: 0, kind: input, shape index: {}]
  %s1 = inlined_call_operand.hbm [shape: f32[256,128], index: 1, kind: input, shape index: {}]
  %s2 = inlined_call_operand.hbm [shape: f32[128,256], index: 2, kind: input, shape index: {}]
  %s3 = inlined_call_operand.hbm [shape: f32[8,256], index: 3, kind: output, shape index: {0}]
  %s4 = inlined_call_operand.hbm [shape: f32[8,128], index: 4, kind: output, shape index: {1}]
  %5 = xla_tuple %s3, %s4
  %s6 = sld [smem:[#allocation0]]
  $region42: #{tpu_custom_call.1} parent=0
    _
  %s8 = ssub.s32 1, %s6
  %s9 = scalar_select 0, %s8, %s6
  $region1: #{tpu_custom_call.1} parent=0
    #allocation2 [shape = 'u8[8192]{0}', space=vmem, size = 0x2000, scoped, tag = 'input window, operand 0, single buffered']
    #allocation3 [shape = 's32[1]{0}', space=sflag, size = 0x4, scoped, tag = 'scoped memory for tpu_custom_call.1']
    #allocation4 [shape = 's32[1]{0}', space=sflag, size = 0x4, scoped, tag = 'scoped memory for tpu_custom_call.1']
    #allocation5 [shape = 'u8[131072]{0}', space=vmem, size = 0x20000, scoped, tag = 'input window, operand 1, single buffered']
    #allocation6 [shape = 's32[1]{0}', space=sflag, size = 0x4, scoped, tag = 'scoped memory for tpu_custom_call.1']
    #allocation7 [shape = 'u8[131072]{0}', space=vmem, size = 0x20000, scoped, tag = 'input window, operand 2, single buffered']
    #allocation8 [shape = 'u8[8192]{0}', space=vmem, size = 0x2000, scoped, tag = 'output window, operand 0, single buffered']
    #allocation9 [shape = 'u8[4096]{0}', space=vmem, size = 0x1000, scoped, tag = 'output window, operand 1, single buffered']
    #allocation10 [shape = 's32[1]{0}', space=sflag, size = 0x4, scoped, tag = 'scoped memory for tpu_custom_call.1']
    %10 = vsyncpa [#allocation3], 0
    %11 = vsyncpa [#allocation6], 0
    %12 = vsyncpa [#allocation4], 0
    %13 = vsyncpa [#allocation10], 0
    // Predicated region
    $region2: #{tpu_custom_call.1} parent=1 // pred_check
      _
    $region3: #{tpu_custom_call.1} parent=1 // pred_check_branch
      %15 = sbr.rel (0) target = $region5
    $region4: #{tpu_custom_call.1} parent=1 // pred_region
      %s17 = ssub.s32 256, 256
      %18 = vsyncadd [#allocation3], %s17
      %s20 = sshll.u32 [#allocation2], 4
      %s21 = int_to_ptr.vmem [resolvable:$true] %s20
      %23 = dma.hbm_to_vmem [thread:$0]  %s0, 256, %s21, [#allocation3]
    $region5: #{tpu_custom_call.1} parent=1 // pred_fallthru
      _
    // Predicated region
    $region6: #{tpu_custom_call.1} parent=1 // pred_check
      _
    $region7: #{tpu_custom_call.1} parent=1 // pred_check_branch
      %25 = sbr.rel (0) target = $region9
    $region8: #{tpu_custom_call.1} parent=1 // pred_region
      %s27 = ssub.s32 4096, 4096
      %28 = vsyncadd [#allocation6], %s27
      %s29 = sshll.u32 [#allocation5], 4
      %s30 = int_to_ptr.vmem [resolvable:$true] %s29
      %35 = dma.hbm_to_vmem [thread:$0]  %s1, 4096, %s30, [#allocation6], 128, 128, 8
    $region9: #{tpu_custom_call.1} parent=1 // pred_fallthru
      _
    // Predicated region
    $region10: #{tpu_custom_call.1} parent=1 // pred_check
      _
    $region11: #{tpu_custom_call.1} parent=1 // pred_check_branch
      %37 = sbr.rel (0) target = $region13
    $region12: #{tpu_custom_call.1} parent=1 // pred_region
      %s39 = ssub.s32 4096, 4096
      %40 = vsyncadd [#allocation6], %s39
      %s41 = sshll.u32 [#allocation7], 4
      %s42 = int_to_ptr.vmem [resolvable:$true] %s41
      %47 = dma.hbm_to_vmem [thread:$0]  %s2, 4096, %s42, [#allocation6], 256, 256, 16
    $region13: #{tpu_custom_call.1} parent=1 // pred_fallthru
      _
    // Predicated region
    $region14: #{tpu_custom_call.1} parent=1 // pred_check
      _
    $region15: #{tpu_custom_call.1} parent=1 // pred_check_branch
      %49 = sbr.rel (0) target = $region17
    $region16: #{tpu_custom_call.1} parent=1 // pred_region
      %50 = dma.done [#allocation3], 256
    $region17: #{tpu_custom_call.1} parent=1 // pred_fallthru
      _
    // Predicated region
    $region18: #{tpu_custom_call.1} parent=1 // pred_check
      _
    $region19: #{tpu_custom_call.1} parent=1 // pred_check_branch
      %52 = sbr.rel (0) target = $region21
    $region20: #{tpu_custom_call.1} parent=1 // pred_region
      %53 = dma.done [#allocation6], 4096
    $region21: #{tpu_custom_call.1} parent=1 // pred_fallthru
      _
    // Predicated region
    $region22: #{tpu_custom_call.1} parent=1 // pred_check
      _
    $region23: #{tpu_custom_call.1} parent=1 // pred_check_branch
      %55 = sbr.rel (0) target = $region25
    $region24: #{tpu_custom_call.1} parent=1 // pred_region
      %56 = dma.done [#allocation6], 4096
    $region25: #{tpu_custom_call.1} parent=1 // pred_fallthru
      _
    %v57 = vld [vmem:[#allocation2] sm:$0xff]
    %v58 = vld [vmem:[#allocation2 + $0x8] sm:$0xff]
    %v59 = vld [vmem:[#allocation5] sm:$0xff]
    %v60 = vld [vmem:[#allocation5 + $0x8] sm:$0xff]
    %v61 = vld [vmem:[#allocation5 + $0x10] sm:$0xff]
    %v62 = vld [vmem:[#allocation5 + $0x18] sm:$0xff]
    %v63 = vld [vmem:[#allocation5 + $0x20] sm:$0xff]
    %v64 = vld [vmem:[#allocation5 + $0x28] sm:$0xff]
    %v65 = vld [vmem:[#allocation5 + $0x30] sm:$0xff]
    %v66 = vld [vmem:[#allocation5 + $0x38] sm:$0xff]
    %v67 = vld [vmem:[#allocation5 + $0x40] sm:$0xff]
    %v68 = vld [vmem:[#allocation5 + $0x48] sm:$0xff]
    %v69 = vld [vmem:[#allocation5 + $0x50] sm:$0xff]
    %v70 = vld [vmem:[#allocation5 + $0x58] sm:$0xff]
    %v71 = vld [vmem:[#allocation5 + $0x60] sm:$0xff]
    %v72 = vld [vmem:[#allocation5 + $0x68] sm:$0xff]
    %v73 = vld [vmem:[#allocation5 + $0x70] sm:$0xff]
    %v74 = vld [vmem:[#allocation5 + $0x78] sm:$0xff]
    %v75 = vld [vmem:[#allocation5 + $0x80] sm:$0xff]
    %v76 = vld [vmem:[#allocation5 + $0x88] sm:$0xff]
    %v77 = vld [vmem:[#allocation5 + $0x90] sm:$0xff]
    %v78 = vld [vmem:[#allocation5 + $0x98] sm:$0xff]
    %v79 = vld [vmem:[#allocation5 + $0xa0] sm:$0xff]
    %v80 = vld [vmem:[#allocation5 + $0xa8] sm:$0xff]
    %v81 = vld [vmem:[#allocation5 + $0xb0] sm:$0xff]
    %v82 = vld [vmem:[#allocation5 + $0xb8] sm:$0xff]
    %v83 = vld [vmem:[#allocation5 + $0xc0] sm:$0xff]
    %v84 = vld [vmem:[#allocation5 + $0xc8] sm:$0xff]
    %v85 = vld [vmem:[#allocation5 + $0xd0] sm:$0xff]
    %v86 = vld [vmem:[#allocation5 + $0xd8] sm:$0xff]
    %v87 = vld [vmem:[#allocation5 + $0xe0] sm:$0xff]
    %v88 = vld [vmem:[#allocation5 + $0xe8] sm:$0xff]
    %v89 = vld [vmem:[#allocation5 + $0xf0] sm:$0xff]
    %v90 = vld [vmem:[#allocation5 + $0xf8] sm:$0xff]
    %91 = vmatprep.subr.mxu0 0.0
    %92 = vmatpush1.msra.mxu0 %v59
    %93 = vmatprep.subr.mxu0 0.0
    %94 = vmatpush1.msra.mxu0 %v60
    %95 = vmatprep.subr.mxu0 0.0
    %96 = vmatpush1.msra.mxu0 %v61
    %97 = vmatprep.subr.mxu0 0.0
    %98 = vmatpush1.msra.mxu0 %v62
    %99 = vmatprep.subr.mxu0 0.0
    %100 = vmatpush1.msra.mxu0 %v63
    %101 = vmatprep.subr.mxu0 0.0
    %102 = vmatpush1.msra.mxu0 %v64
    %103 = vmatprep.subr.mxu0 0.0
    %104 = vmatpush1.msra.mxu0 %v65
    %105 = vmatprep.subr.mxu0 0.0
    %106 = vmatpush1.msra.mxu0 %v66
    %107 = vmatprep.subr.mxu0 0.0
    %108 = vmatpush1.msra.mxu0 %v67
    %109 = vmatprep.subr.mxu0 0.0
    %110 = vmatpush1.msra.mxu0 %v68
    %111 = vmatprep.subr.mxu0 0.0
    %112 = vmatpush1.msra.mxu0 %v69
    %113 = vmatprep.subr.mxu0 0.0
    %114 = vmatpush1.msra.mxu0 %v70
    %115 = vmatprep.subr.mxu0 0.0
    %116 = vmatpush1.msra.mxu0 %v71
    %117 = vmatprep.subr.mxu0 0.0
    %118 = vmatpush1.msra.mxu0 %v72
    %119 = vmatprep.subr.mxu0 0.0
    %120 = vmatpush1.msra.mxu0 %v73
    %121 = vmatprep.subr.mxu0 0.0
    %122 = vmatpush1.msra.mxu0 %v74
    %123 = vmatprep.subr.mxu0 0.0
    %124 = vmatpush1.msra.mxu0 %v75
    %125 = vmatprep.subr.mxu0 0.0
    %126 = vmatpush1.msra.mxu0 %v76
    %127 = vmatprep.subr.mxu0 0.0
    %128 = vmatpush1.msra.mxu0 %v77
    %129 = vmatprep.subr.mxu0 0.0
    %130 = vmatpush1.msra.mxu0 %v78
    %131 = vmatprep.subr.mxu0 0.0
    %132 = vmatpush1.msra.mxu0 %v79
    %133 = vmatprep.subr.mxu0 0.0
    %134 = vmatpush1.msra.mxu0 %v80
    %135 = vmatprep.subr.mxu0 0.0
    %136 = vmatpush1.msra.mxu0 %v81
    %137 = vmatprep.subr.mxu0 0.0
    %138 = vmatpush1.msra.mxu0 %v82
    %139 = vmatprep.subr.mxu0 0.0
    %140 = vmatpush1.msra.mxu0 %v83
    %141 = vmatprep.subr.mxu0 0.0
    %142 = vmatpush1.msra.mxu0 %v84
    %143 = vmatprep.subr.mxu0 0.0
    %144 = vmatpush1.msra.mxu0 %v85
    %145 = vmatprep.subr.mxu0 0.0
    %146 = vmatpush1.msra.mxu0 %v86
    %147 = vmatprep.subr.mxu0 0.0
    %148 = vmatpush1.msra.mxu0 %v87
    %149 = vmatprep.subr.mxu0 0.0
    %150 = vmatpush1.msra.mxu0 %v88
    %151 = vmatprep.subr.mxu0 0.0
    %152 = vmatpush1.msra.mxu0 %v89
    %153 = vmatprep.subr.mxu0 0.0
    %154 = vmatpush1.msra.mxu0 %v90
    %155 = vmatprep.mubr.f32.mxu0 %v58
    %156 = vmatmul.mubr.f32.gmra.mrb[0].mxu0 %v57
    %v157 = vpop.f32.mrb[0].mxu0
    %v158 = vadd.f32 0.0, %v157
    %v159 = vpop.f32.mrb[0].mxu0
    %160 = vdwg.mxu0
    %v161 = vmax.f32 %v158, 0.0
    %162 = vst [vmem:[#allocation9] sm:$0xff] %v161
    %v163 = vld [vmem:[#allocation7] sm:$0xff]
    %v164 = vld [vmem:[#allocation7 + $0x8] sm:$0xff]
    %v165 = vld [vmem:[#allocation7 + $0x10] sm:$0xff]
    %v166 = vld [vmem:[#allocation7 + $0x18] sm:$0xff]
    %v167 = vld [vmem:[#allocation7 + $0x20] sm:$0xff]
    %v168 = vld [vmem:[#allocation7 + $0x28] sm:$0xff]
    %v169 = vld [vmem:[#allocation7 + $0x30] sm:$0xff]
    %v170 = vld [vmem:[#allocation7 + $0x38] sm:$0xff]
    %v171 = vld [vmem:[#allocation7 + $0x40] sm:$0xff]
    %v172 = vld [vmem:[#allocation7 + $0x48] sm:$0xff]
    %v173 = vld [vmem:[#allocation7 + $0x50] sm:$0xff]
    %v174 = vld [vmem:[#allocation7 + $0x58] sm:$0xff]
    %v175 = vld [vmem:[#allocation7 + $0x60] sm:$0xff]
    %v176 = vld [vmem:[#allocation7 + $0x68] sm:$0xff]
    %v177 = vld [vmem:[#allocation7 + $0x70] sm:$0xff]
    %v178 = vld [vmem:[#allocation7 + $0x78] sm:$0xff]
    %v179 = vld [vmem:[#allocation7 + $0x80] sm:$0xff]
    %v180 = vld [vmem:[#allocation7 + $0x88] sm:$0xff]
    %v181 = vld [vmem:[#allocation7 + $0x90] sm:$0xff]
    %v182 = vld [vmem:[#allocation7 + $0x98] sm:$0xff]
    %v183 = vld [vmem:[#allocation7 + $0xa0] sm:$0xff]
    %v184 = vld [vmem:[#allocation7 + $0xa8] sm:$0xff]
    %v185 = vld [vmem:[#allocation7 + $0xb0] sm:$0xff]
    %v186 = vld [vmem:[#allocation7 + $0xb8] sm:$0xff]
    %v187 = vld [vmem:[#allocation7 + $0xc0] sm:$0xff]
    %v188 = vld [vmem:[#allocation7 + $0xc8] sm:$0xff]
    %v189 = vld [vmem:[#allocation7 + $0xd0] sm:$0xff]
    %v190 = vld [vmem:[#allocation7 + $0xd8] sm:$0xff]
    %v191 = vld [vmem:[#allocation7 + $0xe0] sm:$0xff]
    %v192 = vld [vmem:[#allocation7 + $0xe8] sm:$0xff]
    %v193 = vld [vmem:[#allocation7 + $0xf0] sm:$0xff]
    %v194 = vld [vmem:[#allocation7 + $0xf8] sm:$0xff]
    %195 = vmatprep.subr.mxu0 %v164
    %196 = vmatpush1.msra.mxu0 %v163
    %197 = vmatprep.subr.mxu0 %v166
    %198 = vmatpush1.msra.mxu0 %v165
    %199 = vmatprep.subr.mxu0 %v168
    %200 = vmatpush1.msra.mxu0 %v167
    %201 = vmatprep.subr.mxu0 %v170
    %202 = vmatpush1.msra.mxu0 %v169
    %203 = vmatprep.subr.mxu0 %v172
    %204 = vmatpush1.msra.mxu0 %v171
    %205 = vmatprep.subr.mxu0 %v174
    %206 = vmatpush1.msra.mxu0 %v173
    %207 = vmatprep.subr.mxu0 %v176
    %208 = vmatpush1.msra.mxu0 %v175
    %209 = vmatprep.subr.mxu0 %v178
    %210 = vmatpush1.msra.mxu0 %v177
    %211 = vmatprep.subr.mxu0 %v180
    %212 = vmatpush1.msra.mxu0 %v179
    %213 = vmatprep.subr.mxu0 %v182
    %214 = vmatpush1.msra.mxu0 %v181
    %215 = vmatprep.subr.mxu0 %v184
    %216 = vmatpush1.msra.mxu0 %v183
    %217 = vmatprep.subr.mxu0 %v186
    %218 = vmatpush1.msra.mxu0 %v185
    %219 = vmatprep.subr.mxu0 %v188
    %220 = vmatpush1.msra.mxu0 %v187
    %221 = vmatprep.subr.mxu0 %v190
    %222 = vmatpush1.msra.mxu0 %v189
    %223 = vmatprep.subr.mxu0 %v192
    %224 = vmatpush1.msra.mxu0 %v191
    %225 = vmatprep.subr.mxu0 %v194
    %226 = vmatpush1.msra.mxu0 %v193
    %227 = vmatprep.subr.mxu0 0.0
    %228 = vmatpush1.msra.mxu0 0.0
    %229 = vmatprep.subr.mxu0 0.0
    %230 = vmatpush1.msra.mxu0 0.0
    %231 = vmatprep.subr.mxu0 0.0
    %232 = vmatpush1.msra.mxu0 0.0
    %233 = vmatprep.subr.mxu0 0.0
    %234 = vmatpush1.msra.mxu0 0.0
    %235 = vmatprep.subr.mxu0 0.0
    %236 = vmatpush1.msra.mxu0 0.0
    %237 = vmatprep.subr.mxu0 0.0
    %238 = vmatpush1.msra.mxu0 0.0
    %239 = vmatprep.subr.mxu0 0.0
    %240 = vmatpush1.msra.mxu0 0.0
    %241 = vmatprep.subr.mxu0 0.0
    %242 = vmatpush1.msra.mxu0 0.0
    %243 = vmatprep.subr.mxu0 0.0
    %244 = vmatpush1.msra.mxu0 0.0
    %245 = vmatprep.subr.mxu0 0.0
    %246 = vmatpush1.msra.mxu0 0.0
    %247 = vmatprep.subr.mxu0 0.0
    %248 = vmatpush1.msra.mxu0 0.0
    %249 = vmatprep.subr.mxu0 0.0
    %250 = vmatpush1.msra.mxu0 0.0
    %251 = vmatprep.subr.mxu0 0.0
    %252 = vmatpush1.msra.mxu0 0.0
    %253 = vmatprep.subr.mxu0 0.0
    %254 = vmatpush1.msra.mxu0 0.0
    %255 = vmatprep.subr.mxu0 0.0
    %256 = vmatpush1.msra.mxu0 0.0
    %257 = vmatprep.subr.mxu0 0.0
    %258 = vmatpush1.msra.mxu0 0.0
    %259 = vmatprep.mubr.f32.mxu0 0.0
    %260 = vmatmul.mubr.f32.gmra.mrb[0].mxu0 %v161
    %v261 = vpop.f32.mrb[0].mxu0
    %v262 = vadd.f32 0.0, %v261
    %v263 = vpop.f32.mrb[0].mxu0
    %v264 = vadd.f32 0.0, %v263
    %265 = vdwg.mxu0
    %266 = vst [vmem:[#allocation8] sm:$0xff] %v262
    %267 = vst [vmem:[#allocation8 + $0x8] sm:$0xff] %v264
    // Predicated region
    $region26: #{tpu_custom_call.1} parent=1 // pred_check
      _
    $region27: #{tpu_custom_call.1} parent=1 // pred_check_branch
      %269 = sbr.rel (0) target = $region29
    $region28: #{tpu_custom_call.1} parent=1 // pred_region
      %s271 = ssub.s32 256, 256
      %272 = vsyncadd [#allocation4], %s271
      %s274 = sshll.u32 [#allocation8], 4
      %s275 = int_to_ptr.vmem [resolvable:$true] %s274
      %277 = dma.vmem_to_hbm [thread:$0]  %s275, 256, %s3, [#allocation4]
    $region29: #{tpu_custom_call.1} parent=1 // pred_fallthru
      _
    // Predicated region
    $region30: #{tpu_custom_call.1} parent=1 // pred_check
      _
    $region31: #{tpu_custom_call.1} parent=1 // pred_check_branch
      %279 = sbr.rel (0) target = $region33
    $region32: #{tpu_custom_call.1} parent=1 // pred_region
      %s281 = ssub.s32 128, 128
      %282 = vsyncadd [#allocation10], %s281
      %s284 = sshll.u32 [#allocation9], 4
      %s285 = int_to_ptr.vmem [resolvable:$true] %s284
      %287 = dma.vmem_to_hbm [thread:$0]  %s285, 128, %s4, [#allocation10]
    $region33: #{tpu_custom_call.1} parent=1 // pred_fallthru
      _
    // Predicated region
    $region34: #{tpu_custom_call.1} parent=1 // pred_check
      _
    $region35: #{tpu_custom_call.1} parent=1 // pred_check_branch
      %289 = sbr.rel (0) target = $region37
    $region36: #{tpu_custom_call.1} parent=1 // pred_region
      %290 = dma.done [#allocation4], 256
    $region37: #{tpu_custom_call.1} parent=1 // pred_fallthru
      _
    // Predicated region
    $region38: #{tpu_custom_call.1} parent=1 // pred_check
      _
    $region39: #{tpu_custom_call.1} parent=1 // pred_check_branch
      %292 = sbr.rel (0) target = $region41
    $region40: #{tpu_custom_call.1} parent=1 // pred_region
      %293 = dma.done [#allocation10], 128
    $region41: #{tpu_custom_call.1} parent=1 // pred_fallthru
      _
    %294 = vsyncpa [#allocation3], 1
    %295 = vsyncpa [#allocation6], 1
    %296 = vsyncpa [#allocation4], 1
    %297 = vsyncpa [#allocation10], 1

// kernel: tpu_custom_call.1
$region0: #{tpu_custom_call.1}
  #allocation0 [shape = 'u32[]', space=smem, size = 0x4, offset = 0x4, fixed_abs, tag = 'smem constant byte address 0x4 - core index']
  #allocation1 [shape = 'u32[144,128]{1,0:T(1,128)}', space=vmem, size = 0x12000, scoped, tag = 'internal scratch']
  %s0 = inlined_call_operand.hbm [shape: f32[8,256], index: 0, kind: input, shape index: {}]
  %s1 = inlined_call_operand.hbm [shape: f32[256,128], index: 1, kind: input, shape index: {}]
  %s2 = inlined_call_operand.hbm [shape: f32[128,256], index: 2, kind: input, shape index: {}]
  %s3 = inlined_call_operand.hbm [shape: f32[8,256], index: 3, kind: output, shape index: {0}]
  %s4 = inlined_call_operand.hbm [shape: f32[8,128], index: 4, kind: output, shape index: {1}]
  %5 = xla_tuple %s3, %s4
  %s6 = sld [smem:[#allocation0]]
  $region42: #{tpu_custom_call.1} parent=0
    _
  %s8 = ssub.s32 1, %s6
  %s9 = scalar_select 0, %s8, %s6
  $region1: #{tpu_custom_call.1} parent=0
    #allocation2 [shape = 'u8[8192]{0}', space=vmem, size = 0x2000, scoped, tag = 'input window, operand 0, single buffered']
    #allocation3 [shape = 's32[1]{0}', space=sflag, size = 0x4, scoped, tag = 'scoped memory for tpu_custom_call.1']
    #allocation4 [shape = 's32[1]{0}', space=sflag, size = 0x4, scoped, tag = 'scoped memory for tpu_custom_call.1']
    #allocation5 [shape = 'u8[131072]{0}', space=vmem, size = 0x20000, scoped, tag = 'input window, operand 1, single buffered']
    #allocation6 [shape = 's32[1]{0}', space=sflag, size = 0x4, scoped, tag = 'scoped memory for tpu_custom_call.1']
    #allocation7 [shape = 'u8[131072]{0}', space=vmem, size = 0x20000, scoped, tag = 'input window, operand 2, single buffered']
    #allocation8 [shape = 'u8[8192]{0}', space=vmem, size = 0x2000, scoped, tag = 'output window, operand 0, single buffered']
    #allocation9 [shape = 'u8[4096]{0}', space=vmem, size = 0x1000, scoped, tag = 'output window, operand 1, single buffered']
    #allocation10 [shape = 's32[1]{0}', space=sflag, size = 0x4, scoped, tag = 'scoped memory for tpu_custom_call.1']
    %10 = vsyncpa [#allocation3], 0
    %11 = vsyncpa [#allocation6], 0
    %12 = vsyncpa [#allocation4], 0
    %13 = vsyncpa [#allocation10], 0
    // Predicated region
    $region2: #{tpu_custom_call.1} parent=1 // pred_check
      _
    $region3: #{tpu_custom_call.1} parent=1 // pred_check_branch
      %15 = sbr.rel (0) target = $region5
    $region4: #{tpu_custom_call.1} parent=1 // pred_region
      %s17 = ssub.s32 256, 256
      %18 = vsyncadd [#allocation3], %s17
      %s20 = sshll.u32 [#allocation2], 4
      %s21 = int_to_ptr.vmem [resolvable:$true] %s20
      %23 = dma.hbm_to_vmem [thread:$0]  %s0, 256, %s21, [#allocation3]
    $region5: #{tpu_custom_call.1} parent=1 // pred_fallthru
      _
    // Predicated region
    $region6: #{tpu_custom_call.1} parent=1 // pred_check
      _
    $region7: #{tpu_custom_call.1} parent=1 // pred_check_branch
      %25 = sbr.rel (0) target = $region9
    $region8: #{tpu_custom_call.1} parent=1 // pred_region
      %s27 = ssub.s32 4096, 4096
      %28 = vsyncadd [#allocation6], %s27
      %s29 = sshll.u32 [#allocation5], 4
      %s30 = int_to_ptr.vmem [resolvable:$true] %s29
      %35 = dma.hbm_to_vmem [thread:$0]  %s1, 4096, %s30, [#allocation6], 128, 128, 8
    $region9: #{tpu_custom_call.1} parent=1 // pred_fallthru
      _
    // Predicated region
    $region10: #{tpu_custom_call.1} parent=1 // pred_check
      _
    $region11: #{tpu_custom_call.1} parent=1 // pred_check_branch
      %37 = sbr.rel (0) target = $region13
    $region12: #{tpu_custom_call.1} parent=1 // pred_region
      %s39 = ssub.s32 4096, 4096
      %40 = vsyncadd [#allocation6], %s39
      %s41 = sshll.u32 [#allocation7], 4
      %s42 = int_to_ptr.vmem [resolvable:$true] %s41
      %47 = dma.hbm_to_vmem [thread:$0]  %s2, 4096, %s42, [#allocation6], 256, 256, 16
    $region13: #{tpu_custom_call.1} parent=1 // pred_fallthru
      _
    // Predicated region
    $region14: #{tpu_custom_call.1} parent=1 // pred_check
      _
    $region15: #{tpu_custom_call.1} parent=1 // pred_check_branch
      %49 = sbr.rel (0) target = $region17
    $region16: #{tpu_custom_call.1} parent=1 // pred_region
      %50 = dma.done [#allocation3], 256
    $region17: #{tpu_custom_call.1} parent=1 // pred_fallthru
      _
    // Predicated region
    $region18: #{tpu_custom_call.1} parent=1 // pred_check
      _
    $region19: #{tpu_custom_call.1} parent=1 // pred_check_branch
      %52 = sbr.rel (0) target = $region21
    $region20: #{tpu_custom_call.1} parent=1 // pred_region
      %53 = dma.done [#allocation6], 4096
    $region21: #{tpu_custom_call.1} parent=1 // pred_fallthru
      _
    // Predicated region
    $region22: #{tpu_custom_call.1} parent=1 // pred_check
      _
    $region23: #{tpu_custom_call.1} parent=1 // pred_check_branch
      %55 = sbr.rel (0) target = $region25
    $region24: #{tpu_custom_call.1} parent=1 // pred_region
      %56 = dma.done [#allocation6], 4096
    $region25: #{tpu_custom_call.1} parent=1 // pred_fallthru
      _
    %v57 = vld [vmem:[#allocation2] sm:$0xff]
    %v58 = vld [vmem:[#allocation2 + $0x8] sm:$0xff]
    %v59 = vld [vmem:[#allocation5] sm:$0xff]
    %v60 = vld [vmem:[#allocation5 + $0x8] sm:$0xff]
    %v61 = vld [vmem:[#allocation5 + $0x10] sm:$0xff]
    %v62 = vld [vmem:[#allocation5 + $0x18] sm:$0xff]
    %v63 = vld [vmem:[#allocation5 + $0x20] sm:$0xff]
    %v64 = vld [vmem:[#allocation5 + $0x28] sm:$0xff]
    %v65 = vld [vmem:[#allocation5 + $0x30] sm:$0xff]
    %v66 = vld [vmem:[#allocation5 + $0x38] sm:$0xff]
    %v67 = vld [vmem:[#allocation5 + $0x40] sm:$0xff]
    %v68 = vld [vmem:[#allocation5 + $0x48] sm:$0xff]
    %v69 = vld [vmem:[#allocation5 + $0x50] sm:$0xff]
    %v70 = vld [vmem:[#allocation5 + $0x58] sm:$0xff]
    %v71 = vld [vmem:[#allocation5 + $0x60] sm:$0xff]
    %v72 = vld [vmem:[#allocation5 + $0x68] sm:$0xff]
    %v73 = vld [vmem:[#allocation5 + $0x70] sm:$0xff]
    %v74 = vld [vmem:[#allocation5 + $0x78] sm:$0xff]
    %v75 = vld [vmem:[#allocation5 + $0x80] sm:$0xff]
    %v76 = vld [vmem:[#allocation5 + $0x88] sm:$0xff]
    %v77 = vld [vmem:[#allocation5 + $0x90] sm:$0xff]
    %v78 = vld [vmem:[#allocation5 + $0x98] sm:$0xff]
    %v79 = vld [vmem:[#allocation5 + $0xa0] sm:$0xff]
    %v80 = vld [vmem:[#allocation5 + $0xa8] sm:$0xff]
    %v81 = vld [vmem:[#allocation5 + $0xb0] sm:$0xff]
    %v82 = vld [vmem:[#allocation5 + $0xb8] sm:$0xff]
    %v83 = vld [vmem:[#allocation5 + $0xc0] sm:$0xff]
    %v84 = vld [vmem:[#allocation5 + $0xc8] sm:$0xff]
    %v85 = vld [vmem:[#allocation5 + $0xd0] sm:$0xff]
    %v86 = vld [vmem:[#allocation5 + $0xd8] sm:$0xff]
    %v87 = vld [vmem:[#allocation5 + $0xe0] sm:$0xff]
    %v88 = vld [vmem:[#allocation5 + $0xe8] sm:$0xff]
    %v89 = vld [vmem:[#allocation5 + $0xf0] sm:$0xff]
    %v90 = vld [vmem:[#allocation5 + $0xf8] sm:$0xff]
    %91 = vmatprep.subr.mxu0 0.0
    %92 = vmatpush1.msra.mxu0 %v59
    %93 = vmatprep.subr.mxu0 0.0
    %94 = vmatpush1.msra.mxu0 %v60
    %95 = vmatprep.subr.mxu0 0.0
    %96 = vmatpush1.msra.mxu0 %v61
    %97 = vmatprep.subr.mxu0 0.0
    %98 = vmatpush1.msra.mxu0 %v62
    %99 = vmatprep.subr.mxu0 0.0
    %100 = vmatpush1.msra.mxu0 %v63
    %101 = vmatprep.subr.mxu0 0.0
    %102 = vmatpush1.msra.mxu0 %v64
    %103 = vmatprep.subr.mxu0 0.0
    %104 = vmatpush1.msra.mxu0 %v65
    %105 = vmatprep.subr.mxu0 0.0
    %106 = vmatpush1.msra.mxu0 %v66
    %107 = vmatprep.subr.mxu0 0.0
    %108 = vmatpush1.msra.mxu0 %v67
    %109 = vmatprep.subr.mxu0 0.0
    %110 = vmatpush1.msra.mxu0 %v68
    %111 = vmatprep.subr.mxu0 0.0
    %112 = vmatpush1.msra.mxu0 %v69
    %113 = vmatprep.subr.mxu0 0.0
    %114 = vmatpush1.msra.mxu0 %v70
    %115 = vmatprep.subr.mxu0 0.0
    %116 = vmatpush1.msra.mxu0 %v71
    %117 = vmatprep.subr.mxu0 0.0
    %118 = vmatpush1.msra.mxu0 %v72
    %119 = vmatprep.subr.mxu0 0.0
    %120 = vmatpush1.msra.mxu0 %v73
    %121 = vmatprep.subr.mxu0 0.0
    %122 = vmatpush1.msra.mxu0 %v74
    %123 = vmatprep.subr.mxu0 0.0
    %124 = vmatpush1.msra.mxu0 %v75
    %125 = vmatprep.subr.mxu0 0.0
    %126 = vmatpush1.msra.mxu0 %v76
    %127 = vmatprep.subr.mxu0 0.0
    %128 = vmatpush1.msra.mxu0 %v77
    %129 = vmatprep.subr.mxu0 0.0
    %130 = vmatpush1.msra.mxu0 %v78
    %131 = vmatprep.subr.mxu0 0.0
    %132 = vmatpush1.msra.mxu0 %v79
    %133 = vmatprep.subr.mxu0 0.0
    %134 = vmatpush1.msra.mxu0 %v80
    %135 = vmatprep.subr.mxu0 0.0
    %136 = vmatpush1.msra.mxu0 %v81
    %137 = vmatprep.subr.mxu0 0.0
    %138 = vmatpush1.msra.mxu0 %v82
    %139 = vmatprep.subr.mxu0 0.0
    %140 = vmatpush1.msra.mxu0 %v83
    %141 = vmatprep.subr.mxu0 0.0
    %142 = vmatpush1.msra.mxu0 %v84
    %143 = vmatprep.subr.mxu0 0.0
    %144 = vmatpush1.msra.mxu0 %v85
    %145 = vmatprep.subr.mxu0 0.0
    %146 = vmatpush1.msra.mxu0 %v86
    %147 = vmatprep.subr.mxu0 0.0
    %148 = vmatpush1.msra.mxu0 %v87
    %149 = vmatprep.subr.mxu0 0.0
    %150 = vmatpush1.msra.mxu0 %v88
    %151 = vmatprep.subr.mxu0 0.0
    %152 = vmatpush1.msra.mxu0 %v89
    %153 = vmatprep.subr.mxu0 0.0
    %154 = vmatpush1.msra.mxu0 %v90
    %155 = vmatprep.mubr.f32.mxu0 %v58
    %156 = vmatmul.mubr.f32.gmra.mrb[0].mxu0 %v57
    %v157 = vpop.f32.mrb[0].mxu0
    %v158 = vadd.f32 0.0, %v157
    %v159 = vpop.f32.mrb[0].mxu0
    %160 = vdwg.mxu0
    %v161 = vmax.f32 %v158, 0.0
    %162 = vst [vmem:[#allocation9] sm:$0xff] %v161
    %v163 = vld [vmem:[#allocation7] sm:$0xff]
    %v164 = vld [vmem:[#allocation7 + $0x8] sm:$0xff]
    %v165 = vld [vmem:[#allocation7 + $0x10] sm:$0xff]
    %v166 = vld [vmem:[#allocation7 + $0x18] sm:$0xff]
    %v167 = vld [vmem:[#allocation7 + $0x20] sm:$0xff]
    %v168 = vld [vmem:[#allocation7 + $0x28] sm:$0xff]
    %v169 = vld [vmem:[#allocation7 + $0x30] sm:$0xff]
    %v170 = vld [vmem:[#allocation7 + $0x38] sm:$0xff]
    %v171 = vld [vmem:[#allocation7 + $0x40] sm:$0xff]
    %v172 = vld [vmem:[#allocation7 + $0x48] sm:$0xff]
    %v173 = vld [vmem:[#allocation7 + $0x50] sm:$0xff]
    %v174 = vld [vmem:[#allocation7 + $0x58] sm:$0xff]
    %v175 = vld [vmem:[#allocation7 + $0x60] sm:$0xff]
    %v176 = vld [vmem:[#allocation7 + $0x68] sm:$0xff]
    %v177 = vld [vmem:[#allocation7 + $0x70] sm:$0xff]
    %v178 = vld [vmem:[#allocation7 + $0x78] sm:$0xff]
    %v179 = vld [vmem:[#allocation7 + $0x80] sm:$0xff]
    %v180 = vld [vmem:[#allocation7 + $0x88] sm:$0xff]
    %v181 = vld [vmem:[#allocation7 + $0x90] sm:$0xff]
    %v182 = vld [vmem:[#allocation7 + $0x98] sm:$0xff]
    %v183 = vld [vmem:[#allocation7 + $0xa0] sm:$0xff]
    %v184 = vld [vmem:[#allocation7 + $0xa8] sm:$0xff]
    %v185 = vld [vmem:[#allocation7 + $0xb0] sm:$0xff]
    %v186 = vld [vmem:[#allocation7 + $0xb8] sm:$0xff]
    %v187 = vld [vmem:[#allocation7 + $0xc0] sm:$0xff]
    %v188 = vld [vmem:[#allocation7 + $0xc8] sm:$0xff]
    %v189 = vld [vmem:[#allocation7 + $0xd0] sm:$0xff]
    %v190 = vld [vmem:[#allocation7 + $0xd8] sm:$0xff]
    %v191 = vld [vmem:[#allocation7 + $0xe0] sm:$0xff]
    %v192 = vld [vmem:[#allocation7 + $0xe8] sm:$0xff]
    %v193 = vld [vmem:[#allocation7 + $0xf0] sm:$0xff]
    %v194 = vld [vmem:[#allocation7 + $0xf8] sm:$0xff]
    %195 = vmatprep.subr.mxu0 %v164
    %196 = vmatpush1.msra.mxu0 %v163
    %197 = vmatprep.subr.mxu0 %v166
    %198 = vmatpush1.msra.mxu0 %v165
    %199 = vmatprep.subr.mxu0 %v168
    %200 = vmatpush1.msra.mxu0 %v167
    %201 = vmatprep.subr.mxu0 %v170
    %202 = vmatpush1.msra.mxu0 %v169
    %203 = vmatprep.subr.mxu0 %v172
    %204 = vmatpush1.msra.mxu0 %v171
    %205 = vmatprep.subr.mxu0 %v174
    %206 = vmatpush1.msra.mxu0 %v173
    %207 = vmatprep.subr.mxu0 %v176
    %208 = vmatpush1.msra.mxu0 %v175
    %209 = vmatprep.subr.mxu0 %v178
    %210 = vmatpush1.msra.mxu0 %v177
    %211 = vmatprep.subr.mxu0 %v180
    %212 = vmatpush1.msra.mxu0 %v179
    %213 = vmatprep.subr.mxu0 %v182
    %214 = vmatpush1.msra.mxu0 %v181
    %215 = vmatprep.subr.mxu0 %v184
    %216 = vmatpush1.msra.mxu0 %v183
    %217 = vmatprep.subr.mxu0 %v186
    %218 = vmatpush1.msra.mxu0 %v185
    %219 = vmatprep.subr.mxu0 %v188
    %220 = vmatpush1.msra.mxu0 %v187
    %221 = vmatprep.subr.mxu0 %v190
    %222 = vmatpush1.msra.mxu0 %v189
    %223 = vmatprep.subr.mxu0 %v192
    %224 = vmatpush1.msra.mxu0 %v191
    %225 = vmatprep.subr.mxu0 %v194
    %226 = vmatpush1.msra.mxu0 %v193
    %227 = vmatprep.subr.mxu0 0.0
    %228 = vmatpush1.msra.mxu0 0.0
    %229 = vmatprep.subr.mxu0 0.0
    %230 = vmatpush1.msra.mxu0 0.0
    %231 = vmatprep.subr.mxu0 0.0
    %232 = vmatpush1.msra.mxu0 0.0
    %233 = vmatprep.subr.mxu0 0.0
    %234 = vmatpush1.msra.mxu0 0.0
    %235 = vmatprep.subr.mxu0 0.0
    %236 = vmatpush1.msra.mxu0 0.0
    %237 = vmatprep.subr.mxu0 0.0
    %238 = vmatpush1.msra.mxu0 0.0
    %239 = vmatprep.subr.mxu0 0.0
    %240 = vmatpush1.msra.mxu0 0.0
    %241 = vmatprep.subr.mxu0 0.0
    %242 = vmatpush1.msra.mxu0 0.0
    %243 = vmatprep.subr.mxu0 0.0
    %244 = vmatpush1.msra.mxu0 0.0
    %245 = vmatprep.subr.mxu0 0.0
    %246 = vmatpush1.msra.mxu0 0.0
    %247 = vmatprep.subr.mxu0 0.0
    %248 = vmatpush1.msra.mxu0 0.0
    %249 = vmatprep.subr.mxu0 0.0
    %250 = vmatpush1.msra.mxu0 0.0
    %251 = vmatprep.subr.mxu0 0.0
    %252 = vmatpush1.msra.mxu0 0.0
    %253 = vmatprep.subr.mxu0 0.0
    %254 = vmatpush1.msra.mxu0 0.0
    %255 = vmatprep.subr.mxu0 0.0
    %256 = vmatpush1.msra.mxu0 0.0
    %257 = vmatprep.subr.mxu0 0.0
    %258 = vmatpush1.msra.mxu0 0.0
    %259 = vmatprep.mubr.f32.mxu0 0.0
    %260 = vmatmul.mubr.f32.gmra.mrb[0].mxu0 %v161
    %v261 = vpop.f32.mrb[0].mxu0
    %v262 = vadd.f32 0.0, %v261
    %v263 = vpop.f32.mrb[0].mxu0
    %v264 = vadd.f32 0.0, %v263
    %265 = vdwg.mxu0
    %266 = vst [vmem:[#allocation8] sm:$0xff] %v262
    %267 = vst [vmem:[#allocation8 + $0x8] sm:$0xff] %v264
    // Predicated region
    $region26: #{tpu_custom_call.1} parent=1 // pred_check
      _
    $region27: #{tpu_custom_call.1} parent=1 // pred_check_branch
      %269 = sbr.rel (0) target = $region29
    $region28: #{tpu_custom_call.1} parent=1 // pred_region
      %s271 = ssub.s32 256, 256
      %272 = vsyncadd [#allocation4], %s271
      %s274 = sshll.u32 [#allocation8], 4
      %s275 = int_to_ptr.vmem [resolvable:$true] %s274
      %277 = dma.vmem_to_hbm [thread:$0]  %s275, 256, %s3, [#allocation4]
    $region29: #{tpu_custom_call.1} parent=1 // pred_fallthru
      _
    // Predicated region
    $region30: #{tpu_custom_call.1} parent=1 // pred_check
      _
    $region31: #{tpu_custom_call.1} parent=1 // pred_check_branch
      %279 = sbr.rel (0) target = $region33
    $region32: #{tpu_custom_call.1} parent=1 // pred_region
      %s281 = ssub.s32 128, 128
      %282 = vsyncadd [#allocation10], %s281
      %s284 = sshll.u32 [#allocation9], 4
      %s285 = int_to_ptr.vmem [resolvable:$true] %s284
      %287 = dma.vmem_to_hbm [thread:$0]  %s285, 128, %s4, [#allocation10]
    $region33: #{tpu_custom_call.1} parent=1 // pred_fallthru
      _
    // Predicated region
    $region34: #{tpu_custom_call.1} parent=1 // pred_check
      _
    $region35: #{tpu_custom_call.1} parent=1 // pred_check_branch
      %289 = sbr.rel (0) target = $region37
    $region36: #{tpu_custom_call.1} parent=1 // pred_region
      %290 = dma.done [#allocation4], 256
    $region37: #{tpu_custom_call.1} parent=1 // pred_fallthru
      _
    // Predicated region
    $region38: #{tpu_custom_call.1} parent=1 // pred_check
      _
    $region39: #{tpu_custom_call.1} parent=1 // pred_check_branch
      %292 = sbr.rel (0) target = $region41
    $region40: #{tpu_custom_call.1} parent=1 // pred_region
      %293 = dma.done [#allocation10], 128
    $region41: #{tpu_custom_call.1} parent=1 // pred_fallthru
      _
    %294 = vsyncpa [#allocation3], 1
    %295 = vsyncpa [#allocation6], 1
    %296 = vsyncpa [#allocation4], 1
    %297 = vsyncpa [#allocation10], 1

</llo_original>
